<compile_context>
chip_gen: v7x
topology: tpu7x:2x2x1
jax: 0.10.0
libtpu: 0.0.40
codegen_flags: <defaults>
</compile_context>

<pallas_src>
import math

import jax
import jax.numpy as jnp
from jax import lax
from jax.experimental import pallas as pl
from jax.experimental.pallas import tpu as pltpu


def _round_up(x, m):
    return ((x + m - 1) // m) * m


def _full_spec(shape):
    zeros = (0,) * len(shape)
    return pl.BlockSpec(shape, lambda i, _z=zeros: _z)


def bn_fold(gamma, beta, mean, var, eps=1e-5):
    scale = gamma / jnp.sqrt(var + eps)
    return scale, beta - mean * scale


# ----------------------------------------------------------------------------
# 1x1 conv (+ folded BN, ReLU) kernels on flattened pixel rows
# ----------------------------------------------------------------------------
def conv_bn_relu_kernel(x_ref, w_ref, s_ref, b_ref, o_ref):
    # x: (TM, Cin) f32, w: (Cin, Cout) bf16, s/b: (1, Cout), o: (TM, Cout)
    y = jnp.dot(x_ref[...].astype(jnp.bfloat16), w_ref[...],
                preferred_element_type=jnp.float32)
    o_ref[...] = jnp.maximum(y * s_ref[...] + b_ref[...], 0.0)


def relu_conv_bn_add_relu_kernel(x_ref, w_ref, s_ref, b_ref, res_ref, o_ref):
    # relu(x) -> 1x1 conv -> BN affine -> + residual -> relu
    x = jnp.maximum(x_ref[...], 0.0).astype(jnp.bfloat16)
    y = jnp.dot(x, w_ref[...], preferred_element_type=jnp.float32)
    o_ref[...] = jnp.maximum(y * s_ref[...] + b_ref[...] + res_ref[...], 0.0)


def _row_tile(rows):
    if rows <= 1024:
        return _round_up(rows, 8)
    return 512


def conv_bn_relu(x2d, w_t, s_row, b_row):
    R, Cin = x2d.shape
    Cout = w_t.shape[1]
    TM = _row_tile(R)
    Rp = _round_up(R, TM)
    if Rp != R:
        x2d = jnp.pad(x2d, ((0, Rp - R), (0, 0)))
    out = pl.pallas_call(
        conv_bn_relu_kernel,
        out_shape=jax.ShapeDtypeStruct((Rp, Cout), jnp.float32),
        grid_spec=pltpu.PrefetchScalarGridSpec(
            num_scalar_prefetch=0, grid=(Rp // TM,),
            in_specs=[pl.BlockSpec((TM, Cin), lambda i: (i, 0)),
                      _full_spec((Cin, Cout)),
                      _full_spec((1, Cout)),
                      _full_spec((1, Cout))],
            out_specs=pl.BlockSpec((TM, Cout), lambda i: (i, 0))),
        compiler_params=pltpu.CompilerParams(
            dimension_semantics=("parallel",),
            vmem_limit_bytes=32 * 1024 * 1024),
    )(x2d, w_t, s_row, b_row)
    return out[:R]


def relu_conv_bn_add_relu(x2d, w_t, s_row, b_row, res2d):
    R, Cin = x2d.shape
    Cout = w_t.shape[1]
    TM = _row_tile(R)
    Rp = _round_up(R, TM)
    if Rp != R:
        x2d = jnp.pad(x2d, ((0, Rp - R), (0, 0)))
        res2d = jnp.pad(res2d, ((0, Rp - R), (0, 0)))
    out = pl.pallas_call(
        relu_conv_bn_add_relu_kernel,
        out_shape=jax.ShapeDtypeStruct((Rp, Cout), jnp.float32),
        grid_spec=pltpu.PrefetchScalarGridSpec(
            num_scalar_prefetch=0, grid=(Rp // TM,),
            in_specs=[pl.BlockSpec((TM, Cin), lambda i: (i, 0)),
                      _full_spec((Cin, Cout)),
                      _full_spec((1, Cout)),
                      _full_spec((1, Cout)),
                      pl.BlockSpec((TM, Cout), lambda i: (i, 0))],
            out_specs=pl.BlockSpec((TM, Cout), lambda i: (i, 0))),
        compiler_params=pltpu.CompilerParams(
            dimension_semantics=("parallel",),
            vmem_limit_bytes=32 * 1024 * 1024),
    )(x2d, w_t, s_row, b_row, res2d)
    return out[:R]


# ----------------------------------------------------------------------------
# Axial attention kernel: TB rows (length L, C channels) per grid step
# ----------------------------------------------------------------------------
def make_axial_attention_kernel(G, GP, L, OP, TB):
    GPH = GP // 2

    def kernel(x_ref, w_ref, sq_ref, bq_ref,
               qe_ref, ket_ref, ve_ref, eye_ref,
               osv_s_ref, osv_b_ref, osve_s_ref, osve_b_ref,
               sim_s_ref, sim_b_ref, o_ref):
        # qkv projection (1x1 conv == matmul) for the whole row-tile on the MXU.
        x = x_ref[...].astype(jnp.bfloat16)                            # (TB*L, C)
        qkv2 = jnp.dot(x, w_ref[...], preferred_element_type=jnp.float32)
        qkv = qkv2.reshape(TB, L, 2 * OP) * sq_ref[...] + bq_ref[...]  # (TB,L,2OP)

        for g in range(G):
            base = 2 * GP * g
            q = qkv[:, :, base: base + GPH]                # (TB, L, GPH)
            k = qkv[:, :, base + GPH: base + GP]           # (TB, L, GPH)
            v = qkv[:, :, base + GP: base + 2 * GP]        # (TB, L, GP)

            # channel-major k for the qk matmul and the kr positional term
            k_cm = jnp.swapaxes(k, 1, 2)                   # (TB, GPH, L)

            # q k^T on the MXU (batched over the TB rows)
            qk = lax.dot_general(
                q, k_cm, (((2,), (1,)), ((0,), (0,))),
                preferred_element_type=jnp.float32)        # (TB, L, L)

            # relative-position terms: small GPH-deep broadcast accumulations
            # (TB-vectorized VPU work; embeddings are pre-gathered in wrapper)
            qr = q[:, :, 0:1] * qe_ref[0]                  # (TB, L, L)
            kr = k_cm[:, 0:1, :] * ket_ref[0]              # (TB, L, L)
            for c in range(1, GPH):
                qr = qr + q[:, :, c:c + 1] * qe_ref[c]
                kr = kr + k_cm[:, c:c + 1, :] * ket_ref[c]

            # folded bn_similarity + sum of the 3 similarity maps
            logits = (sim_s_ref[g] * qk
                      + sim_s_ref[G + g] * qr
                      + sim_s_ref[2 * G + g] * kr
                      + (sim_b_ref[g] + sim_b_ref[G + g] + sim_b_ref[2 * G + g]))

            # softmax over the key axis
            m = jnp.max(logits, axis=-1, keepdims=True)
            e = jnp.exp(logits - m)
            denom = jnp.sum(e, axis=-1, keepdims=True)
            sim = e * pl.reciprocal(denom, approx=True)    # (TB, L, L)

            # softmax @ v on the MXU
            sv = lax.dot_general(
                sim, v, (((2,), (1,)), ((0,), (0,))),
                preferred_element_type=jnp.float32)        # (TB, L, GP)

            # softmax @ v_embedding; assembled into a lane-dense slab via
            # one-hot columns of the identity (no per-column output stores)
            sve = (jnp.sum(sim * ve_ref[0], axis=-1, keepdims=True)
                   * eye_ref[0:1, :])                      # (TB, L, GP)
            for c in range(1, GP):
                piece = jnp.sum(sim * ve_ref[c], axis=-1, keepdims=True)
                sve = sve + piece * eye_ref[c:c + 1, :]

            # folded bn_output (deinterleaved sv/sve scales) + single dense store
            gsl = slice(g * GP, (g + 1) * GP)
            out_g = (sv * osv_s_ref[:, gsl] + osv_b_ref[:, gsl]
                     + sve * osve_s_ref[:, gsl] + osve_b_ref[:, gsl])
            o_ref[:, :, gsl] = out_g.astype(o_ref.dtype)

    return kernel


def axial_attention_forward(x_lc, attn, groups):
    """x_lc: (B, L, C) rows along the attended axis; returns (B, L, out_planes)."""
    B, L, C = x_lc.shape
    OP = attn['out_planes']
    GP = OP // groups
    GPH = GP // 2

    rel = attn['relative']                                 # (2*GP, 2L-1)
    assert rel.shape[1] == 2 * L - 1, "kernel_size must equal attended length"

    wt = jnp.transpose(attn['w_qkv']).astype(jnp.bfloat16)         # (C, 2*OP)
    sq, bq = bn_fold(*attn['bn_qkv'])
    sq, bq = sq[None, :], bq[None, :]                              # (1, 2*OP)
    sim_s, sim_b = bn_fold(*attn['bn_sim'])                        # (3*G,)
    out_s, out_b = bn_fold(*attn['bn_out'])                        # (2*OP,)
    osv_s, osv_b = out_s[0::2][None, :], out_b[0::2][None, :]      # (1, OP)
    osve_s, osve_b = out_s[1::2][None, :], out_b[1::2][None, :]    # (1, OP)

    # relative positional embeddings, gathered in plain JAX glue
    qi = jnp.arange(L)[None, :]
    ki = jnp.arange(L)[:, None]
    idx = (ki - qi + L - 1).reshape(-1)
    all_emb = rel[:, idx].reshape(2 * GP, L, L)
    qe = all_emb[:GPH]                                     # [c, i, j]
    ket = jnp.transpose(all_emb[GPH:2 * GPH], (0, 2, 1))   # [c, i, j] = ke[c, j, i]
    ve = all_emb[2 * GPH:]                                 # [c, i, j]
    eye_gp = jnp.eye(GP, dtype=jnp.float32)

    TB = B if B <= 32 else 32
    B_pad = _round_up(B, TB)
    if B_pad != B:
        x_lc = jnp.pad(x_lc, ((0, B_pad - B), (0, 0), (0, 0)))
    x_flat = x_lc.reshape(B_pad * L, C)

    kernel = make_axial_attention_kernel(groups, GP, L, OP, TB)
    smem = pl.BlockSpec(memory_space=pltpu.MemorySpace.SMEM)

    out = pl.pallas_call(
        kernel,
        out_shape=jax.ShapeDtypeStruct((B_pad, L, OP), jnp.float32),
        grid_spec=pltpu.PrefetchScalarGridSpec(
            num_scalar_prefetch=0, grid=(B_pad // TB,),
            in_specs=[
                pl.BlockSpec((TB * L, C), lambda i: (i, 0)),
                _full_spec((C, 2 * OP)),
                _full_spec((1, 2 * OP)), _full_spec((1, 2 * OP)),
                _full_spec((GPH, L, L)), _full_spec((GPH, L, L)),
                _full_spec((GP, L, L)), _full_spec((GP, GP)),
                _full_spec((1, OP)), _full_spec((1, OP)),
                _full_spec((1, OP)), _full_spec((1, OP)),
                smem, smem,
            ],
            out_specs=pl.BlockSpec((TB, L, OP), lambda i: (i, 0, 0))),
        compiler_params=pltpu.CompilerParams(
            dimension_semantics=("parallel",),
            vmem_limit_bytes=32 * 1024 * 1024),
    )(x_flat, wt, sq, bq, qe, ket, ve, eye_gp,
      osv_s, osv_b, osve_s, osve_b, sim_s, sim_b)
    return out[:B]


# ----------------------------------------------------------------------------
# Full AxialBlock forward
# ----------------------------------------------------------------------------
def axial_block_forward(x, p):
    """x: (N, Cin, H, W) NCHW float32; returns (N, planes*2, H, W)."""
    N, Cin, H, W = x.shape
    width = p['conv_down_w'].shape[0]
    cout = p['conv_up_w'].shape[0]
    groups = p['groups']

    x_nhwc = jnp.transpose(x, (0, 2, 3, 1))                       # (N,H,W,Cin)
    x_rows = x_nhwc.reshape(N * H * W, Cin)

    # conv_down -> bn1 -> relu
    s1, b1 = bn_fold(*p['bn1'])
    out1 = conv_bn_relu(x_rows, jnp.transpose(p['conv_down_w']).astype(jnp.bfloat16),
                        s1[None, :], b1[None, :])                 # (N*H*W, width)
    out1 = out1.reshape(N, H, W, width)

    # height attention (attend along H): batch over (n, w)
    xh = jnp.transpose(out1, (0, 2, 1, 3)).reshape(N * W, H, width)
    h_out = axial_attention_forward(xh, p['hight'], groups)       # (N*W, H, width)
    h_nhwc = jnp.transpose(h_out.reshape(N, W, H, width), (0, 2, 1, 3))

    # width attention (attend along W): batch over (n, h)
    xw = h_nhwc.reshape(N * H, W, width)
    w_out = axial_attention_forward(xw, p['width_blk'], groups)   # (N*H, W, width)
    w_rows = w_out.reshape(N * H * W, width)

    # relu -> conv_up -> bn2 -> + identity -> relu
    s2, b2 = bn_fold(*p['bn2'])
    out2 = relu_conv_bn_add_relu(w_rows,
                                 jnp.transpose(p['conv_up_w']).astype(jnp.bfloat16),
                                 s2[None, :], b2[None, :], x_rows)  # (N*H*W, cout)
    return jnp.transpose(out2.reshape(N, H, W, cout), (0, 3, 1, 2))


# ----------------------------------------------------------------------------
# Deterministic synthetic parameters (no checkpoint)
# ----------------------------------------------------------------------------
def init_params(key, inplanes=8, planes=4, groups=1, kernel_size=8):
    width = planes                       # base_width == 64
    exp_out = planes * 2

    def bn_params(rk, c):
        k1, k2, k3, k4 = jax.random.split(rk, 4)
        gamma = 1.0 + 0.1 * jax.random.normal(k1, (c,), jnp.float32)
        beta = 0.1 * jax.random.normal(k2, (c,), jnp.float32)
        mean = 0.1 * jax.random.normal(k3, (c,), jnp.float32)
        var = 0.9 + 0.2 * jax.random.uniform(k4, (c,), jnp.float32)
        return (gamma, beta, mean, var)

    def attn_params(rk, in_pl, out_pl):
        gp = out_pl // groups
        k1, k2, k3, k4, k5 = jax.random.split(rk, 5)
        return {
            'out_planes': out_pl,
            'w_qkv': jax.random.normal(k1, (out_pl * 2, in_pl), jnp.float32)
                     * math.sqrt(1.0 / in_pl),
            'bn_qkv': bn_params(k2, out_pl * 2),
            'bn_sim': bn_params(k3, groups * 3),
            'bn_out': bn_params(k4, out_pl * 2),
            'relative': jax.random.normal(k5, (gp * 2, kernel_size * 2 - 1),
                                          jnp.float32) * math.sqrt(1.0 / gp),
        }

    keys = jax.random.split(key, 6)
    return {
        'groups': groups,
        'conv_down_w': jax.random.normal(keys[0], (width, inplanes), jnp.float32)
                       * math.sqrt(2.0 / inplanes),
        'bn1': bn_params(keys[1], width),
        'hight': attn_params(keys[2], width, width),
        'width_blk': attn_params(keys[3], width, width),
        'conv_up_w': jax.random.normal(keys[4], (exp_out, width), jnp.float32)
                     * math.sqrt(2.0 / width),
        'bn2': bn_params(keys[5], exp_out),
    }


if __name__ == "__main__":
    key = jax.random.PRNGKey(0)
    kp, kx = jax.random.split(key)

    N, inplanes, planes, S = 2, 8, 4, 8          # kernel_size = H = W = 8
    params = init_params(kp, inplanes=inplanes, planes=planes,
                         groups=1, kernel_size=S)
    x = jax.random.normal(kx, (N, inplanes, S, S), jnp.float32)

    out = axial_block_forward(x, params)
    out = jax.block_until_ready(out)
    assert out.shape == (N, planes * 2, S, S), out.shape
    assert bool(jnp.all(jnp.isfinite(out)))
    print("KERNEL_OK")
</pallas_src>

<mosaic_0001>
module attributes {stable_mosaic.version = 11 : i64} {
  func.func @conv_bn_relu_kernel(%arg0: i32, %arg1: memref<128x8xf32, #tpu.memory_space<vmem>>, %arg2: memref<8x4xbf16, #tpu.memory_space<vmem>>, %arg3: memref<1x4xf32, #tpu.memory_space<vmem>>, %arg4: memref<1x4xf32, #tpu.memory_space<vmem>>, %arg5: memref<128x4xf32, #tpu.memory_space<vmem>>) attributes {dimension_semantics = [#tpu.dimension_semantics<parallel>], iteration_bounds = array<i64: 1>, scalar_prefetch = 0 : i64, scratch_operands = 0 : i64, tpu.core_type = #tpu.core_type<tc>, window_params = [{transform_indices = @transform_0, window_bounds = array<i64: 128, 8>}, {pipeline_mode = #tpu.pipeline_mode<synchronous>, transform_indices = @transform_1, window_bounds = array<i64: 8, 4>}, {pipeline_mode = #tpu.pipeline_mode<synchronous>, transform_indices = @transform_2, window_bounds = array<i64: 1, 4>}, {pipeline_mode = #tpu.pipeline_mode<synchronous>, transform_indices = @transform_3, window_bounds = array<i64: 1, 4>}, {transform_indices = @transform_4, window_bounds = array<i64: 128, 4>}]} {
    %c0 = arith.constant 0 : index
    %c0_0 = arith.constant 0 : index
    %0 = vector.load %arg1[%c0, %c0_0] : memref<128x8xf32, #tpu.memory_space<vmem>>, vector<128x8xf32>
    %1 = arith.truncf %0 : vector<128x8xf32> to vector<128x8xbf16>
    %c0_1 = arith.constant 0 : index
    %c0_2 = arith.constant 0 : index
    %2 = vector.load %arg2[%c0_1, %c0_2] : memref<8x4xbf16, #tpu.memory_space<vmem>>, vector<8x4xbf16>
    %cst = arith.constant dense<0.000000e+00> : vector<128x4xf32>
    %3 = tpu.matmul %1, %2, %cst {dimension_numbers = #tpu.dot_dimension_numbers<[1], [0], [0], [1], [0, 0, 1, 1], [], []>} : vector<128x8xbf16>, vector<8x4xbf16>, vector<128x4xf32> -> vector<128x4xf32>
    %c0_3 = arith.constant 0 : index
    %c0_4 = arith.constant 0 : index
    %4 = vector.load %arg3[%c0_3, %c0_4] : memref<1x4xf32, #tpu.memory_space<vmem>>, vector<1x4xf32>
    %5 = vector.broadcast %4 : vector<1x4xf32> to vector<128x4xf32>
    %6 = arith.mulf %3, %5 : vector<128x4xf32>
    %c0_5 = arith.constant 0 : index
    %c0_6 = arith.constant 0 : index
    %7 = vector.load %arg4[%c0_5, %c0_6] : memref<1x4xf32, #tpu.memory_space<vmem>>, vector<1x4xf32>
    %8 = vector.broadcast %7 : vector<1x4xf32> to vector<128x4xf32>
    %9 = arith.addf %6, %8 : vector<128x4xf32>
    %cst_7 = arith.constant 0.000000e+00 : f32
    %10 = vector.broadcast %cst_7 : f32 to vector<128x4xf32>
    %11 = arith.maximumf %9, %10 : vector<128x4xf32>
    %c0_8 = arith.constant 0 : index
    %c0_9 = arith.constant 0 : index
    %12 = vector.load %arg5[%c0_8, %c0_9] : memref<128x4xf32, #tpu.memory_space<vmem>>, vector<128x4xf32>
    tpu.vector_store %arg5[%c0_8, %c0_9], %11 {strides = array<i32>} : memref<128x4xf32, #tpu.memory_space<vmem>>, vector<128x4xf32>,
    return
  }
  func.func @transform_0(%arg0: i32) -> (i32, i32) {
    %c0_i32 = arith.constant 0 : i32
    %c0_i32_0 = arith.constant 0 : i32
    return %arg0, %c0_i32 : i32, i32
  }
  func.func @transform_1(%arg0: i32) -> (i32, i32) {
    %c0_i32 = arith.constant 0 : i32
    %c0_i32_0 = arith.constant 0 : i32
    %c0_i32_1 = arith.constant 0 : i32
    return %c0_i32, %c0_i32_0 : i32, i32
  }
  func.func @transform_2(%arg0: i32) -> (i32, i32) {
    %c0_i32 = arith.constant 0 : i32
    %c0_i32_0 = arith.constant 0 : i32
    %c0_i32_1 = arith.constant 0 : i32
    return %c0_i32, %c0_i32_0 : i32, i32
  }
  func.func @transform_3(%arg0: i32) -> (i32, i32) {
    %c0_i32 = arith.constant 0 : i32
    %c0_i32_0 = arith.constant 0 : i32
    %c0_i32_1 = arith.constant 0 : i32
    return %c0_i32, %c0_i32_0 : i32, i32
  }
  func.func @transform_4(%arg0: i32) -> (i32, i32) {
    %c0_i32 = arith.constant 0 : i32
    %c0_i32_0 = arith.constant 0 : i32
    return %arg0, %c0_i32 : i32, i32
  }
}

</mosaic_0001>

<llo_original>
// kernel: tpu_custom_call.1
$region0: #{tpu_custom_call.1}
  #allocation0 [shape = 'u32[]', space=smem, size = 0x4, offset = 0x4, fixed_abs, tag = 'smem constant byte address 0x4 - core index']
  #allocation1 [shape = 'u32[144,128]{1,0:T(1,128)}', space=vmem, size = 0x12000, scoped, tag = 'internal scratch']
  %s0 = inlined_call_operand.vmem [shape: f32[128,8], index: 0, kind: input, shape index: {}]
  %s1 = inlined_call_operand.vmem [shape: bf16[8,4], index: 1, kind: input, shape index: {}]
  %s2 = inlined_call_operand.vmem [shape: f32[1,4], index: 2, kind: input, shape index: {}]
  %s3 = inlined_call_operand.vmem [shape: f32[1,4], index: 3, kind: input, shape index: {}]
  %s4 = inlined_call_operand.vmem [shape: f32[128,4], index: 4, kind: output, shape index: {}]
  %s5 = sld [smem:[#allocation0]]
  $region26: #{tpu_custom_call.1} parent=0
    _
  %s7 = ssub.s32 1, %s5
  %s8 = scalar_select 0, %s7, %s5
  // Predicated region
  $region2: #{tpu_custom_call.1} parent=0 // pred_check
    _
  $region3: #{tpu_custom_call.1} parent=0 // pred_check_branch
    %10 = sbr.rel (0) target = $region5
  $region4: #{tpu_custom_call.1} parent=0 // pred_region
    _
  $region5: #{tpu_custom_call.1} parent=0 // pred_fallthru
    _
  // Predicated region
  $region6: #{tpu_custom_call.1} parent=0 // pred_check
    _
  $region7: #{tpu_custom_call.1} parent=0 // pred_check_branch
    %12 = sbr.rel (0) target = $region9
  $region8: #{tpu_custom_call.1} parent=0 // pred_region
    _
  $region9: #{tpu_custom_call.1} parent=0 // pred_fallthru
    _
  // Predicated region
  $region10: #{tpu_custom_call.1} parent=0 // pred_check
    _
  $region11: #{tpu_custom_call.1} parent=0 // pred_check_branch
    %14 = sbr.rel (0) target = $region13
  $region12: #{tpu_custom_call.1} parent=0 // pred_region
    _
  $region13: #{tpu_custom_call.1} parent=0 // pred_fallthru
    _
  // Predicated region
  $region14: #{tpu_custom_call.1} parent=0 // pred_check
    _
  $region15: #{tpu_custom_call.1} parent=0 // pred_check_branch
    %16 = sbr.rel (0) target = $region17
  $region16: #{tpu_custom_call.1} parent=0 // pred_region
    _
  $region17: #{tpu_custom_call.1} parent=0 // pred_fallthru
    _
  %v18 = vld [vmem:[%s0] sm:$0xff]
  %v19 = vld [vmem:[%s0 + $0x8] sm:$0xff]
  %v20 = vld [vmem:[%s0 + $0x10] sm:$0xff]
  %v21 = vld [vmem:[%s0 + $0x18] sm:$0xff]
  %v22 = vld [vmem:[%s0 + $0x20] sm:$0xff]
  %v23 = vld [vmem:[%s0 + $0x28] sm:$0xff]
  %v24 = vld [vmem:[%s0 + $0x30] sm:$0xff]
  %v25 = vld [vmem:[%s0 + $0x38] sm:$0xff]
  %v26 = vld [vmem:[%s0 + $0x40] sm:$0xff]
  %v27 = vld [vmem:[%s0 + $0x48] sm:$0xff]
  %v28 = vld [vmem:[%s0 + $0x50] sm:$0xff]
  %v29 = vld [vmem:[%s0 + $0x58] sm:$0xff]
  %v30 = vld [vmem:[%s0 + $0x60] sm:$0xff]
  %v31 = vld [vmem:[%s0 + $0x68] sm:$0xff]
  %v32 = vld [vmem:[%s0 + $0x70] sm:$0xff]
  %v33 = vld [vmem:[%s0 + $0x78] sm:$0xff]
  %v34 = vpack.c.bf16 %v19, %v18
  %v35 = vpack.c.bf16 %v21, %v20
  %v36 = vpack.c.bf16 %v23, %v22
  %v37 = vpack.c.bf16 %v25, %v24
  %v38 = vpack.c.bf16 %v27, %v26
  %v39 = vpack.c.bf16 %v29, %v28
  %v40 = vpack.c.bf16 %v31, %v30
  %v41 = vpack.c.bf16 %v33, %v32
  %v42 = vld [vmem:[%s1] sm:$0xf]
  %vm43 = vcmask 64512
  %v45 = vsel %vm43, %v34, 0
  %v48 = vsel %vm43, %v35, 0
  %v51 = vsel %vm43, %v36, 0
  %v54 = vsel %vm43, %v37, 0
  %v57 = vsel %vm43, %v38, 0
  %v60 = vsel %vm43, %v39, 0
  %v63 = vsel %vm43, %v40, 0
  %v66 = vsel %vm43, %v41, 0
  %vm68 = vcmask 1043456
  %v70 = vsel %vm68, %v42, 0
  %72 = vmatprep.subr.bf16.mxu0 0
  %73 = vmatpush1.bf16.msra.mxu0 %v70
  %74 = vmatprep.subr.bf16.mxu0 0
  %75 = vmatpush1.bf16.msra.mxu0 0
  %76 = vmatprep.subr.bf16.mxu0 0
  %77 = vmatpush1.bf16.msra.mxu0 0
  %78 = vmatprep.subr.bf16.mxu0 0
  %79 = vmatpush1.bf16.msra.mxu0 0
  %80 = vmatprep.subr.bf16.mxu0 0
  %81 = vmatpush1.bf16.msra.mxu0 0
  %82 = vmatprep.subr.bf16.mxu0 0
  %83 = vmatpush1.bf16.msra.mxu0 0
  %84 = vmatprep.subr.bf16.mxu0 0
  %85 = vmatpush1.bf16.msra.mxu0 0
  %86 = vmatprep.subr.bf16.mxu0 0
  %87 = vmatpush1.bf16.msra.mxu0 0
  %88 = vmatprep.subr.bf16.mxu0 0
  %89 = vmatpush1.bf16.msra.mxu0 0
  %90 = vmatprep.subr.bf16.mxu0 0
  %91 = vmatpush1.bf16.msra.mxu0 0
  %92 = vmatprep.subr.bf16.mxu0 0
  %93 = vmatpush1.bf16.msra.mxu0 0
  %94 = vmatprep.subr.bf16.mxu0 0
  %95 = vmatpush1.bf16.msra.mxu0 0
  %96 = vmatprep.subr.bf16.mxu0 0
  %97 = vmatpush1.bf16.msra.mxu0 0
  %98 = vmatprep.subr.bf16.mxu0 0
  %99 = vmatpush1.bf16.msra.mxu0 0
  %100 = vmatprep.subr.bf16.mxu0 0
  %101 = vmatpush1.bf16.msra.mxu0 0
  %102 = vmatprep.subr.bf16.mxu0 0
  %103 = vmatpush1.bf16.msra.mxu0 0
  %104 = vmatprep.mubr.bf16.mxu0 0
  %105 = vmatmul.mubr.bf16.gmra.mrb[0].mxu0 %v45
  %v106 = vpop.f32.mrb[0].mxu0
  %v107 = vadd.f32 0.0, %v106
  %v108 = vpop.f32.mrb[0].mxu0
  %v109 = vpop.f32.mrb[0].mxu0
  %v110 = vadd.f32 0.0, %v109
  %v111 = vpop.f32.mrb[0].mxu0
  %112 = vmatprep.mubr.bf16.mxu0 0
  %113 = vmatmul.mubr.bf16.gmra.mrb[0].mxu0 %v48
  %v114 = vpop.f32.mrb[0].mxu0
  %v115 = vadd.f32 0.0, %v114
  %v116 = vpop.f32.mrb[0].mxu0
  %v117 = vpop.f32.mrb[0].mxu0
  %v118 = vadd.f32 0.0, %v117
  %v119 = vpop.f32.mrb[0].mxu0
  %120 = vmatprep.mubr.bf16.mxu0 0
  %121 = vmatmul.mubr.bf16.gmra.mrb[0].mxu0 %v51
  %v122 = vpop.f32.mrb[0].mxu0
  %v123 = vadd.f32 0.0, %v122
  %v124 = vpop.f32.mrb[0].mxu0
  %v125 = vpop.f32.mrb[0].mxu0
  %v126 = vadd.f32 0.0, %v125
  %v127 = vpop.f32.mrb[0].mxu0
  %128 = vmatprep.mubr.bf16.mxu0 0
  %129 = vmatmul.mubr.bf16.gmra.mrb[0].mxu0 %v54
  %v130 = vpop.f32.mrb[0].mxu0
  %v131 = vadd.f32 0.0, %v130
  %v132 = vpop.f32.mrb[0].mxu0
  %v133 = vpop.f32.mrb[0].mxu0
  %v134 = vadd.f32 0.0, %v133
  %v135 = vpop.f32.mrb[0].mxu0
  %136 = vmatprep.mubr.bf16.mxu0 0
  %137 = vmatmul.mubr.bf16.gmra.mrb[0].mxu0 %v57
  %v138 = vpop.f32.mrb[0].mxu0
  %v139 = vadd.f32 0.0, %v138
  %v140 = vpop.f32.mrb[0].mxu0
  %v141 = vpop.f32.mrb[0].mxu0
  %v142 = vadd.f32 0.0, %v141
  %v143 = vpop.f32.mrb[0].mxu0
  %144 = vmatprep.mubr.bf16.mxu0 0
  %145 = vmatmul.mubr.bf16.gmra.mrb[0].mxu0 %v60
  %v146 = vpop.f32.mrb[0].mxu0
  %v147 = vadd.f32 0.0, %v146
  %v148 = vpop.f32.mrb[0].mxu0
  %v149 = vpop.f32.mrb[0].mxu0
  %v150 = vadd.f32 0.0, %v149
  %v151 = vpop.f32.mrb[0].mxu0
  %152 = vmatprep.mubr.bf16.mxu0 0
  %153 = vmatmul.mubr.bf16.gmra.mrb[0].mxu0 %v63
  %v154 = vpop.f32.mrb[0].mxu0
  %v155 = vadd.f32 0.0, %v154
  %v156 = vpop.f32.mrb[0].mxu0
  %v157 = vpop.f32.mrb[0].mxu0
  %v158 = vadd.f32 0.0, %v157
  %v159 = vpop.f32.mrb[0].mxu0
  %160 = vmatprep.mubr.bf16.mxu0 0
  %161 = vmatmul.mubr.bf16.gmra.mrb[0].mxu0 %v66
  %v162 = vpop.f32.mrb[0].mxu0
  %v163 = vadd.f32 0.0, %v162
  %v164 = vpop.f32.mrb[0].mxu0
  %v165 = vpop.f32.mrb[0].mxu0
  %v166 = vadd.f32 0.0, %v165
  %v167 = vpop.f32.mrb[0].mxu0
  %168 = vdwg.mxu0
  %v169 = vld [vmem:[%s2] sm:$0x1]
  %v171 = vlaneseq
  %v172 = vshrl.u32 %v171, 7
  %v173 = vsub.s32 0, %v172
  %v174 = vrot.slane %v169, %v173
  %v176 = vmul.f32 %v107, %v174
  %v177 = vmul.f32 %v110, %v174
  %v178 = vmul.f32 %v115, %v174
  %v179 = vmul.f32 %v118, %v174
  %v180 = vmul.f32 %v123, %v174
  %v181 = vmul.f32 %v126, %v174
  %v182 = vmul.f32 %v131, %v174
  %v183 = vmul.f32 %v134, %v174
  %v184 = vmul.f32 %v139, %v174
  %v185 = vmul.f32 %v142, %v174
  %v186 = vmul.f32 %v147, %v174
  %v187 = vmul.f32 %v150, %v174
  %v188 = vmul.f32 %v155, %v174
  %v189 = vmul.f32 %v158, %v174
  %v190 = vmul.f32 %v163, %v174
  %v191 = vmul.f32 %v166, %v174
  %v192 = vld [vmem:[%s3] sm:$0x1]
  %v194 = vlaneseq
  %v195 = vshrl.u32 %v194, 7
  %v196 = vsub.s32 0, %v195
  %v197 = vrot.slane %v192, %v196
  %v199 = vadd.f32 %v176, %v197
  %v200 = vadd.f32 %v177, %v197
  %v201 = vadd.f32 %v178, %v197
  %v202 = vadd.f32 %v179, %v197
  %v203 = vadd.f32 %v180, %v197
  %v204 = vadd.f32 %v181, %v197
  %v205 = vadd.f32 %v182, %v197
  %v206 = vadd.f32 %v183, %v197
  %v207 = vadd.f32 %v184, %v197
  %v208 = vadd.f32 %v185, %v197
  %v209 = vadd.f32 %v186, %v197
  %v210 = vadd.f32 %v187, %v197
  %v211 = vadd.f32 %v188, %v197
  %v212 = vadd.f32 %v189, %v197
  %v213 = vadd.f32 %v190, %v197
  %v214 = vadd.f32 %v191, %v197
  %v215 = vmax.f32 %v199, 0.0
  %v216 = vmax.f32 %v200, 0.0
  %v217 = vmax.f32 %v201, 0.0
  %v218 = vmax.f32 %v202, 0.0
  %v219 = vmax.f32 %v203, 0.0
  %v220 = vmax.f32 %v204, 0.0
  %v221 = vmax.f32 %v205, 0.0
  %v222 = vmax.f32 %v206, 0.0
  %v223 = vmax.f32 %v207, 0.0
  %v224 = vmax.f32 %v208, 0.0
  %v225 = vmax.f32 %v209, 0.0
  %v226 = vmax.f32 %v210, 0.0
  %v227 = vmax.f32 %v211, 0.0
  %v228 = vmax.f32 %v212, 0.0
  %v229 = vmax.f32 %v213, 0.0
  %v230 = vmax.f32 %v214, 0.0
  %vm231 = vcmask 31744
  %232 = vst.msk [vmem:[%s4] sm:$0xff] %vm231, %v215
  %233 = vst.msk [vmem:[%s4 + $0x8] sm:$0xff] %vm231, %v216
  %234 = vst.msk [vmem:[%s4 + $0x10] sm:$0xff] %vm231, %v217
  %235 = vst.msk [vmem:[%s4 + $0x18] sm:$0xff] %vm231, %v218
  %236 = vst.msk [vmem:[%s4 + $0x20] sm:$0xff] %vm231, %v219
  %237 = vst.msk [vmem:[%s4 + $0x28] sm:$0xff] %vm231, %v220
  %238 = vst.msk [vmem:[%s4 + $0x30] sm:$0xff] %vm231, %v221
  %239 = vst.msk [vmem:[%s4 + $0x38] sm:$0xff] %vm231, %v222
  %240 = vst.msk [vmem:[%s4 + $0x40] sm:$0xff] %vm231, %v223
  %241 = vst.msk [vmem:[%s4 + $0x48] sm:$0xff] %vm231, %v224
  %242 = vst.msk [vmem:[%s4 + $0x50] sm:$0xff] %vm231, %v225
  %243 = vst.msk [vmem:[%s4 + $0x58] sm:$0xff] %vm231, %v226
  %244 = vst.msk [vmem:[%s4 + $0x60] sm:$0xff] %vm231, %v227
  %245 = vst.msk [vmem:[%s4 + $0x68] sm:$0xff] %vm231, %v228
  %246 = vst.msk [vmem:[%s4 + $0x70] sm:$0xff] %vm231, %v229
  %247 = vst.msk [vmem:[%s4 + $0x78] sm:$0xff] %vm231, %v230
  // Predicated region
  $region18: #{tpu_custom_call.1} parent=0 // pred_check
    _
  $region19: #{tpu_custom_call.1} parent=0 // pred_check_branch
    %249 = sbr.rel (0) target = $region21
  $region20: #{tpu_custom_call.1} parent=0 // pred_region
    _
  $region21: #{tpu_custom_call.1} parent=0 // pred_fallthru
    _
  // Predicated region
  $region22: #{tpu_custom_call.1} parent=0 // pred_check
    _
  $region23: #{tpu_custom_call.1} parent=0 // pred_check_branch
    %251 = sbr.rel (0) target = $region25
  $region24: #{tpu_custom_call.1} parent=0 // pred_region
    _
  $region25: #{tpu_custom_call.1} parent=0 // pred_fallthru
    _

</llo_original>
